<compile_context>
chip_gen: v5e
topology: v5e:2x2
jax: 0.10.0
libtpu: 0.0.40
codegen_flags: <defaults>
</compile_context>

<pallas_src>
import jax
import jax.numpy as jnp
import numpy as np
from jax.experimental import pallas as pl
from jax.experimental.pallas import tpu as pltpu


def _round_up(x, m):
    return ((x + m - 1) // m) * m


# --------------------------------------------------------------------------
# reduction == 'mean': scalar output, global accumulators in VMEM scratch.
# --------------------------------------------------------------------------
def _lm_mean_kernel(target_ref, logp_ref, mask_ref, lenN_ref,
                    out_ref, acc_loss_ref, acc_mask_ref):
    ri = pl.program_id(0)
    vi = pl.program_id(1)
    nr = pl.num_programs(0)
    nv = pl.num_programs(1)

    @pl.when(jnp.logical_and(ri == 0, vi == 0))
    def _init():
        acc_loss_ref[...] = jnp.zeros_like(acc_loss_ref)
        acc_mask_ref[...] = jnp.zeros_like(acc_mask_ref)

    logp = logp_ref[...].astype(jnp.float32)        # (TR, L, TV) - upcast in-kernel
    target = target_ref[...]                        # (TR, L) int32
    mask = mask_ref[...].astype(jnp.float32)        # (TR, L)

    TR, L, TV = logp.shape
    # global vocab index of each lane in this chunk
    v_iota = vi * TV + jax.lax.broadcasted_iota(jnp.int32, (TR, L, TV), 2)
    # gather via masked select + lane reduction (partial: 0 unless label in chunk)
    gathered = jnp.sum(jnp.where(v_iota == target[:, :, None], logp, 0.0),
                       axis=2)                      # (TR, L)
    word_sum = jnp.sum(-gathered * mask, keepdims=True)   # (1, 1)
    acc_loss_ref[...] += word_sum

    # mask-sum and length-loss depend only on the row tile: count once per
    # row tile (first vocab chunk), never per chunk.
    @pl.when(vi == 0)
    def _once_per_row_tile():
        lenN = lenN_ref[...].astype(jnp.float32)                  # (TR, 1)
        row_mask = jnp.sum(mask, axis=1, keepdims=True)           # (TR, 1)
        acc_loss_ref[...] += jnp.sum((row_mask - lenN) ** 2, keepdims=True)
        acc_mask_ref[...] += jnp.sum(mask, keepdims=True)

    @pl.when(jnp.logical_and(ri == nr - 1, vi == nv - 1))
    def _finalize():
        out_ref[...] = acc_loss_ref[...] / acc_mask_ref[...]


# --------------------------------------------------------------------------
# reduction == 'none': per-row output, per-row-tile accumulator across vocab
# chunks. Row tiles are independent -> row axis is megacore-parallel.
# --------------------------------------------------------------------------
def _lm_none_kernel(target_ref, logp_ref, mask_ref, lenN_ref,
                    out_ref, acc_ref):
    vi = pl.program_id(1)
    nv = pl.num_programs(1)

    @pl.when(vi == 0)
    def _init():
        acc_ref[...] = jnp.zeros_like(acc_ref)

    logp = logp_ref[...].astype(jnp.float32)        # (TR, L, TV)
    target = target_ref[...]                        # (TR, L)
    mask = mask_ref[...].astype(jnp.float32)        # (TR, L)

    TR, L, TV = logp.shape
    v_iota = vi * TV + jax.lax.broadcasted_iota(jnp.int32, (TR, L, TV), 2)
    gathered = jnp.sum(jnp.where(v_iota == target[:, :, None], logp, 0.0),
                       axis=2)                      # (TR, L)
    acc_ref[...] += jnp.sum(-gathered * mask, axis=1, keepdims=True)  # (TR, 1)

    @pl.when(vi == nv - 1)
    def _finalize():
        lenN = lenN_ref[...].astype(jnp.float32)                  # (TR, 1)
        row_mask = jnp.sum(mask, axis=1, keepdims=True)           # (TR, 1)
        length_loss = (row_mask - lenN) ** 2                      # (TR, 1)
        out_ref[...] = (acc_ref[...] + 0.1 * length_loss) / row_mask


# --------------------------------------------------------------------------
# wrapper
# --------------------------------------------------------------------------
def language_model_criterion_nnaic(length_N, word_logprob, target, mask,
                                   reduction='mean',
                                   row_tile=None, vocab_tile=None,
                                   logp_block_budget_bytes=8 * 1024 * 1024):
    """Pallas TPU port of LanguageModelCriterion_NNAIC.forward."""
    # module glue: 3-D target/mask -> 2-D, crop to prediction length.
    if target.ndim == 3:
        target = target.reshape(-1, target.shape[2])
        mask = mask.reshape(-1, mask.shape[2])
    N, L, V = word_logprob.shape
    target = target[:, :L].astype(jnp.int32)
    mask = mask[:, :L]                              # dtype cast happens in-kernel
    length_N = jnp.reshape(length_N, (-1,)).astype(jnp.float32)[:, None]  # (N, 1)

    itemsize = jnp.dtype(word_logprob.dtype).itemsize

    # ---- vocab chunking: full V if a (8, L, V) double-buffered slab fits the
    #      budget, otherwise split into 128-lane multiples that divide V. ----
    if vocab_tile is not None:
        TV = int(vocab_tile)
    elif V % 128 == 0 and 2 * 8 * L * V * itemsize > logp_block_budget_bytes:
        TV = max(128, (logp_block_budget_bytes // (2 * 8 * L * itemsize)) // 128 * 128)
        while V % TV != 0:
            TV -= 128
    else:
        TV = V
    assert V % TV == 0, "vocab tile must divide V"

    # ---- row tiling: multiple of 8 sublanes, sized so two pipeline buffers
    #      of the log-prob block stay within the VMEM budget. ----
    if row_tile is not None:
        TR = _round_up(int(row_tile), 8)
    else:
        rows_fit = logp_block_budget_bytes // (2 * L * TV * itemsize)
        TR = max(8, min(512, (rows_fit // 8) * 8, _round_up(N, 8)))
    Rp = _round_up(N, TR)

    # pad rows so the grid divides evenly; padded rows contribute exactly zero
    # (mask == 0 and length == length_N == 0).
    if Rp != N:
        pad = Rp - N
        word_logprob = jnp.pad(word_logprob, ((0, pad), (0, 0), (0, 0)))
        target = jnp.pad(target, ((0, pad), (0, 0)))
        mask = jnp.pad(mask, ((0, pad), (0, 0)))
        length_N = jnp.pad(length_N, ((0, pad), (0, 0)))

    grid = (Rp // TR, V // TV)

    in_specs = [
        pl.BlockSpec((TR, L), lambda ri, vi: (ri, 0)),           # target
        pl.BlockSpec((TR, L, TV), lambda ri, vi: (ri, 0, vi)),   # word_logprob
        pl.BlockSpec((TR, L), lambda ri, vi: (ri, 0)),           # mask
        pl.BlockSpec((TR, 1), lambda ri, vi: (ri, 0)),           # length_N
    ]

    if reduction == 'mean':
        out = pl.pallas_call(
            _lm_mean_kernel,
            out_shape=jax.ShapeDtypeStruct((1, 1), jnp.float32),
            grid=grid,
            in_specs=in_specs,
            out_specs=pl.BlockSpec((1, 1), lambda ri, vi: (0, 0)),
            scratch_shapes=[pltpu.VMEM((1, 1), jnp.float32),   # loss accumulator
                            pltpu.VMEM((1, 1), jnp.float32)],  # mask-sum accumulator
            compiler_params=pltpu.CompilerParams(
                dimension_semantics=("arbitrary", "arbitrary")),
        )(target, word_logprob, mask, length_N)
        return out[0, 0]

    elif reduction == 'none':
        out = pl.pallas_call(
            _lm_none_kernel,
            out_shape=jax.ShapeDtypeStruct((Rp, 1), jnp.float32),
            grid=grid,
            in_specs=in_specs,
            out_specs=pl.BlockSpec((TR, 1), lambda ri, vi: (ri, 0)),
            scratch_shapes=[pltpu.VMEM((TR, 1), jnp.float32)],
            compiler_params=pltpu.CompilerParams(
                dimension_semantics=("parallel", "arbitrary")),
        )(target, word_logprob, mask, length_N)
        return out[:N, 0]

    else:
        raise ValueError(f"unknown reduction: {reduction}")


# --------------------------------------------------------------------------
# pure-JAX reference of the PyTorch forward
# --------------------------------------------------------------------------
def _reference(length_N, word_logprob, target, mask, reduction='mean'):
    if target.ndim == 3:
        target = target.reshape(-1, target.shape[2])
        mask = mask.reshape(-1, mask.shape[2])
    N, L, V = word_logprob.shape
    target = target[:, :L].astype(jnp.int32)
    mask = mask[:, :L].astype(word_logprob.dtype)
    length_N = jnp.reshape(length_N, (-1,)).astype(jnp.float32)
    g = jnp.take_along_axis(word_logprob, target[:, :, None], axis=2)[:, :, 0]
    word_loss = -g * mask
    length = jnp.sum(mask, axis=1).astype(jnp.float32)
    length_loss = (length - length_N) ** 2
    if reduction == 'none':
        return (jnp.sum(word_loss, axis=1) + 0.1 * length_loss) / jnp.sum(mask, axis=1)
    return (jnp.sum(word_loss) + jnp.sum(length_loss)) / jnp.sum(mask)


if __name__ == "__main__":
    key = jax.random.PRNGKey(0)
    B, M = 2, 2              # 3-D target/mask get reshaped by the module glue
    L, V = 8, 256            # sequence length, vocab size
    N = B * M

    k1, k2, k3, k4 = jax.random.split(key, 4)

    word_logprob = jax.nn.log_softmax(
        jax.random.normal(k1, (N, L, V), dtype=jnp.float32), axis=-1)
    target = jax.random.randint(k2, (B, M, L), 0, V, dtype=jnp.int32)
    valid = jax.random.randint(k3, (B, M, 1), 2, L + 1, dtype=jnp.int32)
    mask = (jnp.arange(L)[None, None, :] < valid).astype(jnp.float32)
    length_N = jax.random.randint(k4, (N,), 1, L + 1).astype(jnp.float32)

    # 'mean' (default tiling: single vocab chunk)
    out_mean = language_model_criterion_nnaic(
        length_N, word_logprob, target, mask, reduction='mean')
    # 'mean' with the vocab-chunked path forced (TV=128 -> 2 chunks)
    out_mean_chunked = language_model_criterion_nnaic(
        length_N, word_logprob, target, mask, reduction='mean', vocab_tile=128)
    # 'none' (per-sample loss)
    out_none = language_model_criterion_nnaic(
        length_N, word_logprob, target, mask, reduction='none')
    jax.block_until_ready((out_mean, out_mean_chunked, out_none))

    ref_mean = _reference(length_N, word_logprob, target, mask, 'mean')
    ref_none = _reference(length_N, word_logprob, target, mask, 'none')

    np.testing.assert_allclose(np.asarray(out_mean), np.asarray(ref_mean),
                               rtol=1e-5, atol=1e-5)
    np.testing.assert_allclose(np.asarray(out_mean_chunked), np.asarray(ref_mean),
                               rtol=1e-5, atol=1e-5)
    np.testing.assert_allclose(np.asarray(out_none), np.asarray(ref_none),
                               rtol=1e-5, atol=1e-5)
    print("KERNEL_OK")
</pallas_src>

<mosaic_0001>
module attributes {stable_mosaic.version = 11 : i64} {
  func.func @_lm_mean_kernel(%arg0: i32, %arg1: i32, %arg2: memref<8x8xi32, #tpu.memory_space<vmem>>, %arg3: memref<8x8x256xf32, #tpu.memory_space<vmem>>, %arg4: memref<8x8xf32, #tpu.memory_space<vmem>>, %arg5: memref<8x1xf32, #tpu.memory_space<vmem>>, %arg6: memref<1x1xf32, #tpu.memory_space<vmem>>, %arg7: memref<1x1xf32, #tpu.memory_space<vmem>>, %arg8: memref<1x1xf32, #tpu.memory_space<vmem>>) attributes {dimension_semantics = [#tpu.dimension_semantics<arbitrary>, #tpu.dimension_semantics<arbitrary>], iteration_bounds = array<i64: 1, 1>, scalar_prefetch = 0 : i64, scratch_operands = 2 : i64, tpu.core_type = #tpu.core_type<tc>, window_params = [{transform_indices = @transform_0, window_bounds = array<i64: 8, 8>}, {transform_indices = @transform_1, window_bounds = array<i64: 8, 8, 256>}, {transform_indices = @transform_2, window_bounds = array<i64: 8, 8>}, {transform_indices = @transform_3, window_bounds = array<i64: 8, 1>}, {pipeline_mode = #tpu.pipeline_mode<synchronous>, transform_indices = @transform_4, window_bounds = array<i64: 1, 1>}]} {
    %c0_i32 = arith.constant 0 : i32
    %0 = arith.cmpi eq, %arg0, %c0_i32 : i32
    %c0_i32_0 = arith.constant 0 : i32
    %1 = arith.cmpi eq, %arg1, %c0_i32_0 : i32
    %2 = arith.andi %0, %1 : i1
    %3 = arith.extui %2 : i1 to i32
    %c0_i32_1 = arith.constant 0 : i32
    %4 = arith.cmpi ne, %3, %c0_i32_1 : i32
    scf.if %4 {
      %cst_20 = arith.constant 0.000000e+00 : f32
      %37 = vector.broadcast %cst_20 : f32 to vector<1x1xf32>
      %c0_21 = arith.constant 0 : index
      %c0_22 = arith.constant 0 : index
      %38 = vector.load %arg7[%c0_21, %c0_22] : memref<1x1xf32, #tpu.memory_space<vmem>>, vector<1x1xf32>
      tpu.vector_store %arg7[%c0_21, %c0_22], %37 {strides = array<i32>} : memref<1x1xf32, #tpu.memory_space<vmem>>, vector<1x1xf32>,
      %cst_23 = arith.constant 0.000000e+00 : f32
      %39 = vector.broadcast %cst_23 : f32 to vector<1x1xf32>
      %c0_24 = arith.constant 0 : index
      %c0_25 = arith.constant 0 : index
      %40 = vector.load %arg8[%c0_24, %c0_25] : memref<1x1xf32, #tpu.memory_space<vmem>>, vector<1x1xf32>
      tpu.vector_store %arg8[%c0_24, %c0_25], %39 {strides = array<i32>} : memref<1x1xf32, #tpu.memory_space<vmem>>, vector<1x1xf32>,
    } else {
    }
    %c0 = arith.constant 0 : index
    %c0_2 = arith.constant 0 : index
    %c0_3 = arith.constant 0 : index
    %5 = vector.load %arg3[%c0, %c0_2, %c0_3] : memref<8x8x256xf32, #tpu.memory_space<vmem>>, vector<8x8x256xf32>
    %c0_4 = arith.constant 0 : index
    %c0_5 = arith.constant 0 : index
    %6 = vector.load %arg2[%c0_4, %c0_5] : memref<8x8xi32, #tpu.memory_space<vmem>>, vector<8x8xi32>
    %c0_6 = arith.constant 0 : index
    %c0_7 = arith.constant 0 : index
    %7 = vector.load %arg4[%c0_6, %c0_7] : memref<8x8xf32, #tpu.memory_space<vmem>>, vector<8x8xf32>
    %c256_i32 = arith.constant 256 : i32
    %8 = arith.muli %arg1, %c256_i32 : i32
    %9 = tpu.iota {dimensions = array<i32: 2>} : vector<8x8x256xi32>
    %10 = vector.broadcast %8 : i32 to vector<8x8x256xi32>
    %11 = arith.addi %10, %9 : vector<8x8x256xi32>
    %12 = vector.shape_cast %6 : vector<8x8xi32> to vector<8x8x1xi32>
    %13 = vector.broadcast %12 : vector<8x8x1xi32> to vector<8x8x256xi32>
    %14 = arith.cmpi eq, %11, %13 : vector<8x8x256xi32>
    %cst = arith.constant 0.000000e+00 : f32
    %15 = vector.broadcast %cst : f32 to vector<8x8x256xf32>
    %16 = arith.select %14, %5, %15 : vector<8x8x256xi1>, vector<8x8x256xf32>
    %cst_8 = arith.constant dense<0.000000e+00> : vector<8x8xf32>
    %17 = vector.multi_reduction <add>, %16, %cst_8 [2] : vector<8x8x256xf32> to vector<8x8xf32>
    %cst_9 = arith.constant 0.000000e+00 : f32
    %18 = vector.broadcast %cst_9 : f32 to vector<8x8xf32>
    %19 = arith.subf %18, %17 : vector<8x8xf32>
    %20 = arith.mulf %19, %7 : vector<8x8xf32>
    %21 = vector.shape_cast %20 : vector<8x8xf32> to vector<1x8x8xf32>
    %cst_10 = arith.constant dense<0.000000e+00> : vector<1xf32>
    %22 = vector.multi_reduction <add>, %21, %cst_10 [1, 2] : vector<1x8x8xf32> to vector<1xf32>
    %23 = vector.shape_cast %22 : vector<1xf32> to vector<1x1x1xf32>
    %24 = vector.extract %23[0, 0, 0] : f32 from vector<1x1x1xf32>
    %25 = vector.broadcast %24 : f32 to vector<1x1xf32>
    %c0_11 = arith.constant 0 : index
    %c0_12 = arith.constant 0 : index
    %26 = vector.load %arg7[%c0_11, %c0_12] : memref<1x1xf32, #tpu.memory_space<vmem>>, vector<1x1xf32>
    %27 = arith.addf %26, %25 : vector<1x1xf32>
    %c0_13 = arith.constant 0 : index
    %c0_14 = arith.constant 0 : index
    %28 = vector.load %arg7[%c0_13, %c0_14] : memref<1x1xf32, #tpu.memory_space<vmem>>, vector<1x1xf32>
    tpu.vector_store %arg7[%c0_13, %c0_14], %27 {strides = array<i32>} : memref<1x1xf32, #tpu.memory_space<vmem>>, vector<1x1xf32>,
    %c0_i32_15 = arith.constant 0 : i32
    %29 = arith.cmpi eq, %arg1, %c0_i32_15 : i32
    %30 = arith.extui %29 : i1 to i32
    %c0_i32_16 = arith.constant 0 : i32
    %31 = arith.cmpi ne, %30, %c0_i32_16 : i32
    scf.if %31 {
      %c0_20 = arith.constant 0 : index
      %c0_21 = arith.constant 0 : index
      %37 = vector.load %arg5[%c0_20, %c0_21] : memref<8x1xf32, #tpu.memory_space<vmem>>, vector<8x1xf32>
      %cst_22 = arith.constant dense<0.000000e+00> : vector<8xf32>
      %38 = vector.multi_reduction <add>, %7, %cst_22 [1] : vector<8x8xf32> to vector<8xf32>
      %39 = vector.shape_cast %38 : vector<8xf32> to vector<8x1xf32>
      %c0_23 = arith.constant 0 : index
      %c0_24 = arith.constant 0 : index
      %40 = vector.load %arg7[%c0_23, %c0_24] : memref<1x1xf32, #tpu.memory_space<vmem>>, vector<1x1xf32>
      %41 = arith.subf %39, %37 : vector<8x1xf32>
      %42 = arith.mulf %41, %41 : vector<8x1xf32>
      %43 = vector.shape_cast %42 : vector<8x1xf32> to vector<1x8x1xf32>
      %cst_25 = arith.constant dense<0.000000e+00> : vector<1xf32>
      %44 = vector.multi_reduction <add>, %43, %cst_25 [1, 2] : vector<1x8x1xf32> to vector<1xf32>
      %45 = vector.shape_cast %44 : vector<1xf32> to vector<1x1x1xf32>
      %46 = vector.extract %45[0, 0, 0] : f32 from vector<1x1x1xf32>
      %47 = vector.broadcast %46 : f32 to vector<1x1xf32>
      %48 = arith.addf %40, %47 : vector<1x1xf32>
      %c0_26 = arith.constant 0 : index
      %c0_27 = arith.constant 0 : index
      %49 = vector.load %arg7[%c0_26, %c0_27] : memref<1x1xf32, #tpu.memory_space<vmem>>, vector<1x1xf32>
      tpu.vector_store %arg7[%c0_26, %c0_27], %48 {strides = array<i32>} : memref<1x1xf32, #tpu.memory_space<vmem>>, vector<1x1xf32>,
      %c0_28 = arith.constant 0 : index
      %c0_29 = arith.constant 0 : index
      %50 = vector.load %arg8[%c0_28, %c0_29] : memref<1x1xf32, #tpu.memory_space<vmem>>, vector<1x1xf32>
      %51 = vector.shape_cast %7 : vector<8x8xf32> to vector<1x8x8xf32>
      %cst_30 = arith.constant dense<0.000000e+00> : vector<1xf32>
      %52 = vector.multi_reduction <add>, %51, %cst_30 [1, 2] : vector<1x8x8xf32> to vector<1xf32>
      %53 = vector.shape_cast %52 : vector<1xf32> to vector<1x1x1xf32>
      %54 = vector.extract %53[0, 0, 0] : f32 from vector<1x1x1xf32>
      %55 = vector.broadcast %54 : f32 to vector<1x1xf32>
      %56 = arith.addf %50, %55 : vector<1x1xf32>
      %c0_31 = arith.constant 0 : index
      %c0_32 = arith.constant 0 : index
      %57 = vector.load %arg8[%c0_31, %c0_32] : memref<1x1xf32, #tpu.memory_space<vmem>>, vector<1x1xf32>
      tpu.vector_store %arg8[%c0_31, %c0_32], %56 {strides = array<i32>} : memref<1x1xf32, #tpu.memory_space<vmem>>, vector<1x1xf32>,
    } else {
    }
    %c0_i32_17 = arith.constant 0 : i32
    %32 = arith.cmpi eq, %arg0, %c0_i32_17 : i32
    %c0_i32_18 = arith.constant 0 : i32
    %33 = arith.cmpi eq, %arg1, %c0_i32_18 : i32
    %34 = arith.andi %32, %33 : i1
    %35 = arith.extui %34 : i1 to i32
    %c0_i32_19 = arith.constant 0 : i32
    %36 = arith.cmpi ne, %35, %c0_i32_19 : i32
    scf.if %36 {
      %c0_20 = arith.constant 0 : index
      %c0_21 = arith.constant 0 : index
      %37 = vector.load %arg7[%c0_20, %c0_21] : memref<1x1xf32, #tpu.memory_space<vmem>>, vector<1x1xf32>
      %c0_22 = arith.constant 0 : index
      %c0_23 = arith.constant 0 : index
      %38 = vector.load %arg8[%c0_22, %c0_23] : memref<1x1xf32, #tpu.memory_space<vmem>>, vector<1x1xf32>
      %39 = arith.divf %37, %38 : vector<1x1xf32>
      %c0_24 = arith.constant 0 : index
      %c0_25 = arith.constant 0 : index
      %40 = vector.load %arg6[%c0_24, %c0_25] : memref<1x1xf32, #tpu.memory_space<vmem>>, vector<1x1xf32>
      tpu.vector_store %arg6[%c0_24, %c0_25], %39 {strides = array<i32>} : memref<1x1xf32, #tpu.memory_space<vmem>>, vector<1x1xf32>,
    } else {
    }
    return
  }
  func.func @transform_0(%arg0: i32, %arg1: i32) -> (i32, i32) {
    %c0_i32 = arith.constant 0 : i32
    %c0_i32_0 = arith.constant 0 : i32
    return %arg0, %c0_i32 : i32, i32
  }
  func.func @transform_1(%arg0: i32, %arg1: i32) -> (i32, i32, i32) {
    %c0_i32 = arith.constant 0 : i32
    %c0_i32_0 = arith.constant 0 : i32
    return %arg0, %c0_i32, %arg1 : i32, i32, i32
  }
  func.func @transform_2(%arg0: i32, %arg1: i32) -> (i32, i32) {
    %c0_i32 = arith.constant 0 : i32
    %c0_i32_0 = arith.constant 0 : i32
    return %arg0, %c0_i32 : i32, i32
  }
  func.func @transform_3(%arg0: i32, %arg1: i32) -> (i32, i32) {
    %c0_i32 = arith.constant 0 : i32
    %c0_i32_0 = arith.constant 0 : i32
    return %arg0, %c0_i32 : i32, i32
  }
  func.func @transform_4(%arg0: i32, %arg1: i32) -> (i32, i32) {
    %c0_i32 = arith.constant 0 : i32
    %c0_i32_0 = arith.constant 0 : i32
    %c0_i32_1 = arith.constant 0 : i32
    return %c0_i32, %c0_i32_0 : i32, i32
  }
}

</mosaic_0001>

<llo_original>
// kernel: tpu_custom_call.1
$region0: #{tpu_custom_call.1}
  #allocation0 [shape = 'u32[]', space=smem, size = 0x4, offset = 0x4, fixed_abs, tag = 'smem constant byte address 0x4 - core index']
  #allocation1 [shape = 'u32[72,128]{1,0:T(1,128)}', space=vmem, size = 0x9000, scoped, tag = 'internal scratch']
  #allocation2 [shape = 'f32[1,1]{1,0:T(1,128)}', space=vmem, size = 0x200, scoped, tag = 'scratch operand']
  #allocation3 [shape = 'f32[1,1]{1,0:T(1,128)}', space=vmem, size = 0x200, scoped, tag = 'scratch operand']
  %s0 = inlined_call_operand.vmem [shape: s32[8,8], index: 0, kind: input, shape index: {}]
  %s1 = inlined_call_operand.hbm [shape: f32[8,8,256], index: 1, kind: input, shape index: {}]
  %s2 = inlined_call_operand.hbm [shape: f32[8,8], index: 2, kind: input, shape index: {}]
  %s3 = inlined_call_operand.vmem [shape: f32[8,1], index: 3, kind: input, shape index: {}]
  %s4 = inlined_call_operand.hbm [shape: f32[1,1], index: 4, kind: output, shape index: {}]
  %s5 = sld [smem:[#allocation0]]
  $region46: #{tpu_custom_call.1} parent=0
    _
  %s7 = ssub.s32 1, %s5
  %s8 = scalar_select 0, %s7, %s5
  $region1: #{tpu_custom_call.1} parent=0
    #allocation4 [shape = 'u8[65536]{0}', space=vmem, size = 0x10000, scoped, tag = 'input window, operand 1, single buffered']
    #allocation5 [shape = 's32[1]{0}', space=sflag, size = 0x4, scoped, tag = 'scoped memory for tpu_custom_call.1']
    #allocation6 [shape = 's32[1]{0}', space=sflag, size = 0x4, scoped, tag = 'scoped memory for tpu_custom_call.1']
    #allocation7 [shape = 'u8[4096]{0}', space=vmem, size = 0x1000, scoped, tag = 'input window, operand 2, single buffered']
    #allocation8 [shape = 's32[1]{0}', space=sflag, size = 0x4, scoped, tag = 'scoped memory for tpu_custom_call.1']
    #allocation9 [shape = 'u8[512]{0}', space=vmem, size = 0x400, scoped, tag = 'output window, operand 0, single buffered']
    %9 = vsyncpa [#allocation5], 0
    %10 = vsyncpa [#allocation8], 0
    %11 = vsyncpa [#allocation6], 0
    // Predicated region
    $region2: #{tpu_custom_call.1} parent=1 // pred_check
      _
    $region3: #{tpu_custom_call.1} parent=1 // pred_check_branch
      %13 = sbr.rel (0) target = $region5
    $region4: #{tpu_custom_call.1} parent=1 // pred_region
      _
    $region5: #{tpu_custom_call.1} parent=1 // pred_fallthru
      _
    // Predicated region
    $region6: #{tpu_custom_call.1} parent=1 // pred_check
      _
    $region7: #{tpu_custom_call.1} parent=1 // pred_check_branch
      %15 = sbr.rel (0) target = $region9
    $region8: #{tpu_custom_call.1} parent=1 // pred_region
      %17 = vsyncadd [#allocation5], 0
      %s18 = sshll.u32 %s1, 4
      %s19 = int_to_ptr.hbm [resolvable:$true] %s18
      %s20 = sshll.u32 [#allocation4], 4
      %s21 = int_to_ptr.vmem [resolvable:$true] %s20
      %26 = dma.hbm_to_vmem [thread:$0]  %s19, 2048, %s21, [#allocation5], 256, 256, 16
    $region9: #{tpu_custom_call.1} parent=1 // pred_fallthru
      _
    // Predicated region
    $region10: #{tpu_custom_call.1} parent=1 // pred_check
      _
    $region11: #{tpu_custom_call.1} parent=1 // pred_check_branch
      %28 = sbr.rel (0) target = $region13
    $region12: #{tpu_custom_call.1} parent=1 // pred_region
      %30 = vsyncadd [#allocation8], 0
      %s32 = sshll.u32 %s2, 4
      %s33 = int_to_ptr.hbm [resolvable:$true] %s32
      %s34 = sshll.u32 [#allocation7], 4
      %s35 = int_to_ptr.vmem [resolvable:$true] %s34
      %37 = dma.hbm_to_vmem [thread:$0]  %s33, 128, %s35, [#allocation8]
    $region13: #{tpu_custom_call.1} parent=1 // pred_fallthru
      _
    // Predicated region
    $region14: #{tpu_custom_call.1} parent=1 // pred_check
      _
    $region15: #{tpu_custom_call.1} parent=1 // pred_check_branch
      %39 = sbr.rel (0) target = $region17
    $region16: #{tpu_custom_call.1} parent=1 // pred_region
      _
    $region17: #{tpu_custom_call.1} parent=1 // pred_fallthru
      _
    // Predicated region
    $region18: #{tpu_custom_call.1} parent=1 // pred_check
      _
    $region19: #{tpu_custom_call.1} parent=1 // pred_check_branch
      %41 = sbr.rel (0) target = $region21
    $region20: #{tpu_custom_call.1} parent=1 // pred_region
      %43 = dma.done [#allocation5], 2048
    $region21: #{tpu_custom_call.1} parent=1 // pred_fallthru
      _
    // Predicated region
    $region22: #{tpu_custom_call.1} parent=1 // pred_check
      _
    $region23: #{tpu_custom_call.1} parent=1 // pred_check_branch
      %45 = sbr.rel (0) target = $region25
    $region24: #{tpu_custom_call.1} parent=1 // pred_region
      %47 = dma.done [#allocation8], 128
    $region25: #{tpu_custom_call.1} parent=1 // pred_fallthru
      _
    %p48 = scmp.eq.s32.totalorder 0, 0
    %p49 = scmp.eq.s32.totalorder 0, 0
    %p50 = pnand %p48, %p49
    %p51 = pneg %p50
    // Predicated region
    $region26: #{tpu_custom_call.1} parent=1 // pred_check
      _
    $region27: #{tpu_custom_call.1} parent=1 // pred_check_branch
      %53 = sbr.rel (%p50) target = $region29
    $region28: #{tpu_custom_call.1} parent=1 // pred_region
      %vm54 = vcmask 0
      %55 = vst.msk [vmem:[#allocation2] sm:$0x1] %vm54, 0.0
      %56 = vst.msk [vmem:[#allocation3] sm:$0x1] %vm54, 0.0
    $region29: #{tpu_custom_call.1} parent=1 // pred_fallthru
      _
    %v57 = vld [vmem:[#allocation4] sm:$0xff]
    %v58 = vld [vmem:[#allocation4 + $0x8] sm:$0xff]
    %v59 = vld [vmem:[#allocation4 + $0x10] sm:$0xff]
    %v60 = vld [vmem:[#allocation4 + $0x18] sm:$0xff]
    %v61 = vld [vmem:[#allocation4 + $0x20] sm:$0xff]
    %v62 = vld [vmem:[#allocation4 + $0x28] sm:$0xff]
    %v63 = vld [vmem:[#allocation4 + $0x30] sm:$0xff]
    %v64 = vld [vmem:[#allocation4 + $0x38] sm:$0xff]
    %v65 = vld [vmem:[#allocation4 + $0x40] sm:$0xff]
    %v66 = vld [vmem:[#allocation4 + $0x48] sm:$0xff]
    %v67 = vld [vmem:[#allocation4 + $0x50] sm:$0xff]
    %v68 = vld [vmem:[#allocation4 + $0x58] sm:$0xff]
    %v69 = vld [vmem:[#allocation4 + $0x60] sm:$0xff]
    %v70 = vld [vmem:[#allocation4 + $0x68] sm:$0xff]
    %v71 = vld [vmem:[#allocation4 + $0x70] sm:$0xff]
    %v72 = vld [vmem:[#allocation4 + $0x78] sm:$0xff]
    %v73 = vld [vmem:[%s0] sm:$0xff]
    %v74 = vld [vmem:[#allocation7] sm:$0xff]
    %s75 = smul.u32 0, 256
    %v76 = vlaneseq
    %v77 = vand.u32 %v76, 127
    %v78 = vadd.s32 %v77, 128
    %v79 = vstv %s75
    %v80 = vadd.s32 %v79, %v77
    %v81 = vadd.s32 %v79, %v78
    %v82 = vperm.slane %v73, 0
    %v83 = vlaneseq
    %v84 = vshrl.u32 %v83, 7
    %86 = vset.pattern.permute.xlu0 %v84
    %87 = vperm.xlu0 %86, %v82
    %v88 = vpop.permute.xlu0 %87
    %v89 = vperm.slane %v73, 1
    %v90 = vlaneseq
    %v91 = vshrl.u32 %v90, 7
    %93 = vset.pattern.permute.xlu0 %v91
    %94 = vperm.xlu0 %93, %v89
    %v95 = vpop.permute.xlu0 %94
    %v96 = vperm.slane %v73, 2
    %v97 = vlaneseq
    %v98 = vshrl.u32 %v97, 7
    %100 = vset.pattern.permute.xlu0 %v98
    %101 = vperm.xlu0 %100, %v96
    %v102 = vpop.permute.xlu0 %101
    %v103 = vperm.slane %v73, 3
    %v104 = vlaneseq
    %v105 = vshrl.u32 %v104, 7
    %107 = vset.pattern.permute.xlu0 %v105
    %108 = vperm.xlu0 %107, %v103
    %v109 = vpop.permute.xlu0 %108
    %v110 = vperm.slane %v73, 4
    %v111 = vlaneseq
    %v112 = vshrl.u32 %v111, 7
    %114 = vset.pattern.permute.xlu0 %v112
    %115 = vperm.xlu0 %114, %v110
    %v116 = vpop.permute.xlu0 %115
    %v117 = vperm.slane %v73, 5
    %v118 = vlaneseq
    %v119 = vshrl.u32 %v118, 7
    %121 = vset.pattern.permute.xlu0 %v119
    %122 = vperm.xlu0 %121, %v117
    %v123 = vpop.permute.xlu0 %122
    %v124 = vperm.slane %v73, 6
    %v125 = vlaneseq
    %v126 = vshrl.u32 %v125, 7
    %128 = vset.pattern.permute.xlu0 %v126
    %129 = vperm.xlu0 %128, %v124
    %v130 = vpop.permute.xlu0 %129
    %v131 = vperm.slane %v73, 7
    %v132 = vlaneseq
    %v133 = vshrl.u32 %v132, 7
    %135 = vset.pattern.permute.xlu0 %v133
    %136 = vperm.xlu0 %135, %v131
    %v137 = vpop.permute.xlu0 %136
    %vm138 = vcmp.eq.s32.totalorder %v80, %v88
    %vm139 = vcmp.eq.s32.totalorder %v81, %v88
    %vm140 = vcmp.eq.s32.totalorder %v80, %v95
    %vm141 = vcmp.eq.s32.totalorder %v81, %v95
    %vm142 = vcmp.eq.s32.totalorder %v80, %v102
    %vm143 = vcmp.eq.s32.totalorder %v81, %v102
    %vm144 = vcmp.eq.s32.totalorder %v80, %v109
    %vm145 = vcmp.eq.s32.totalorder %v81, %v109
    %vm146 = vcmp.eq.s32.totalorder %v80, %v116
    %vm147 = vcmp.eq.s32.totalorder %v81, %v116
    %vm148 = vcmp.eq.s32.totalorder %v80, %v123
    %vm149 = vcmp.eq.s32.totalorder %v81, %v123
    %vm150 = vcmp.eq.s32.totalorder %v80, %v130
    %vm151 = vcmp.eq.s32.totalorder %v81, %v130
    %vm152 = vcmp.eq.s32.totalorder %v80, %v137
    %vm153 = vcmp.eq.s32.totalorder %v81, %v137
    %v154 = vsel %vm138, %v57, 0.0
    %v155 = vsel %vm139, %v58, 0.0
    %v156 = vsel %vm140, %v59, 0.0
    %v157 = vsel %vm141, %v60, 0.0
    %v158 = vsel %vm142, %v61, 0.0
    %v159 = vsel %vm143, %v62, 0.0
    %v160 = vsel %vm144, %v63, 0.0
    %v161 = vsel %vm145, %v64, 0.0
    %v162 = vsel %vm146, %v65, 0.0
    %v163 = vsel %vm147, %v66, 0.0
    %v164 = vsel %vm148, %v67, 0.0
    %v165 = vsel %vm149, %v68, 0.0
    %v166 = vsel %vm150, %v69, 0.0
    %v167 = vsel %vm151, %v70, 0.0
    %v168 = vsel %vm152, %v71, 0.0
    %v169 = vsel %vm153, %v72, 0.0
    %v170 = vadd.f32 %v154, %v155
    %171 = vadd.xlane.f32.xlu0 %v170
    %v172 = vpop.xlane.xlu0 %171
    %v173 = vadd.f32 %v156, %v157
    %174 = vadd.xlane.f32.xlu0 %v173
    %v175 = vpop.xlane.xlu0 %174
    %v176 = vadd.f32 %v158, %v159
    %177 = vadd.xlane.f32.xlu0 %v176
    %v178 = vpop.xlane.xlu0 %177
    %v179 = vadd.f32 %v160, %v161
    %180 = vadd.xlane.f32.xlu0 %v179
    %v181 = vpop.xlane.xlu0 %180
    %v182 = vadd.f32 %v162, %v163
    %183 = vadd.xlane.f32.xlu0 %v182
    %v184 = vpop.xlane.xlu0 %183
    %v185 = vadd.f32 %v164, %v165
    %186 = vadd.xlane.f32.xlu0 %v185
    %v187 = vpop.xlane.xlu0 %186
    %v188 = vadd.f32 %v166, %v167
    %189 = vadd.xlane.f32.xlu0 %v188
    %v190 = vpop.xlane.xlu0 %189
    %v191 = vadd.f32 %v168, %v169
    %192 = vadd.xlane.f32.xlu0 %v191
    %v193 = vpop.xlane.xlu0 %192
    %v194 = vsub.f32 0.0, %v172
    %v195 = vsub.f32 0.0, %v175
    %v196 = vsub.f32 0.0, %v178
    %v197 = vsub.f32 0.0, %v181
    %v198 = vsub.f32 0.0, %v184
    %v199 = vsub.f32 0.0, %v187
    %v200 = vsub.f32 0.0, %v190
    %v201 = vsub.f32 0.0, %v193
    %v203 = vperm.slane %v74, 0
    %v204 = vlaneseq
    %v205 = vshrl.u32 %v204, 7
    %207 = vset.pattern.permute.xlu0 %v205
    %208 = vperm.xlu0 %207, %v203
    %v209 = vpop.permute.xlu0 %208
    %v210 = vperm.slane %v74, 1
    %v211 = vlaneseq
    %v212 = vshrl.u32 %v211, 7
    %214 = vset.pattern.permute.xlu0 %v212
    %215 = vperm.xlu0 %214, %v210
    %v216 = vpop.permute.xlu0 %215
    %v217 = vperm.slane %v74, 2
    %v218 = vlaneseq
    %v219 = vshrl.u32 %v218, 7
    %221 = vset.pattern.permute.xlu0 %v219
    %222 = vperm.xlu0 %221, %v217
    %v223 = vpop.permute.xlu0 %222
    %v224 = vperm.slane %v74, 3
    %v225 = vlaneseq
    %v226 = vshrl.u32 %v225, 7
    %228 = vset.pattern.permute.xlu0 %v226
    %229 = vperm.xlu0 %228, %v224
    %v230 = vpop.permute.xlu0 %229
    %v231 = vperm.slane %v74, 4
    %v232 = vlaneseq
    %v233 = vshrl.u32 %v232, 7
    %235 = vset.pattern.permute.xlu0 %v233
    %236 = vperm.xlu0 %235, %v231
    %v237 = vpop.permute.xlu0 %236
    %v238 = vperm.slane %v74, 5
    %v239 = vlaneseq
    %v240 = vshrl.u32 %v239, 7
    %242 = vset.pattern.permute.xlu0 %v240
    %243 = vperm.xlu0 %242, %v238
    %v244 = vpop.permute.xlu0 %243
    %v245 = vperm.slane %v74, 6
    %v246 = vlaneseq
    %v247 = vshrl.u32 %v246, 7
    %249 = vset.pattern.permute.xlu0 %v247
    %250 = vperm.xlu0 %249, %v245
    %v251 = vpop.permute.xlu0 %250
    %v252 = vperm.slane %v74, 7
    %v253 = vlaneseq
    %v254 = vshrl.u32 %v253, 7
    %256 = vset.pattern.permute.xlu0 %v254
    %257 = vperm.xlu0 %256, %v252
    %v258 = vpop.permute.xlu0 %257
    %v267 = vmul.f32 %v194, %v209
    %v268 = vmul.f32 %v195, %v216
    %v269 = vmul.f32 %v196, %v223
    %v270 = vmul.f32 %v197, %v230
    %v271 = vmul.f32 %v198, %v237
    %v272 = vmul.f32 %v199, %v244
    %v273 = vmul.f32 %v200, %v251
    %v274 = vmul.f32 %v201, %v258
    %283 = vset.pattern.permute.xlu0 0
    %284 = vperm.xlu0 %283, %v267
    %v285 = vpop.permute.xlu0 %284
    %286 = vset.pattern.permute.xlu0 0
    %287 = vperm.xlu0 %286, %v268
    %v288 = vpop.permute.xlu0 %287
    %289 = vset.pattern.permute.xlu0 0
    %290 = vperm.xlu0 %289, %v269
    %v291 = vpop.permute.xlu0 %290
    %292 = vset.pattern.permute.xlu0 0
    %293 = vperm.xlu0 %292, %v270
    %v294 = vpop.permute.xlu0 %293
    %295 = vset.pattern.permute.xlu0 0
    %296 = vperm.xlu0 %295, %v271
    %v297 = vpop.permute.xlu0 %296
    %298 = vset.pattern.permute.xlu0 0
    %299 = vperm.xlu0 %298, %v272
    %v300 = vpop.permute.xlu0 %299
    %301 = vset.pattern.permute.xlu0 0
    %302 = vperm.xlu0 %301, %v273
    %v303 = vpop.permute.xlu0 %302
    %304 = vset.pattern.permute.xlu0 0
    %305 = vperm.xlu0 %304, %v274
    %v306 = vpop.permute.xlu0 %305
    %v307 = vperm.slane %v285, %v77
    %v308 = vperm.slane %v288, %v77
    %v309 = vperm.slane %v291, %v77
    %v310 = vperm.slane %v294, %v77
    %v311 = vperm.slane %v297, %v77
    %v312 = vperm.slane %v300, %v77
    %v313 = vperm.slane %v303, %v77
    %v314 = vperm.slane %v306, %v77
    %vm315 = vcmask 1041409
    %v316 = vsel %vm315, %v308, %v307
    %vm317 = vcmask 1042434
    %v318 = vsel %vm317, %v309, %v316
    %vm319 = vcmask 1043459
    %v320 = vsel %vm319, %v310, %v318
    %vm321 = vcmask 1044484
    %v322 = vsel %vm321, %v311, %v320
    %vm323 = vcmask 1045509
    %v324 = vsel %vm323, %v312, %v322
    %vm325 = vcmask 1046534
    %v326 = vsel %vm325, %v313, %v324
    %vm327 = vcmask 1047559
    %v328 = vsel %vm327, %v314, %v326
    %vm330 = vcmask 64512
    %v331 = vsel %vm330, %v328, 0.0
    %332 = vadd.xlane.f32.xlu0 %v331
    %v333 = vpop.xlane.xlu0 %332
    %v334 = vrot.slane %v333, 4
    %v335 = vadd.f32 %v333, %v334
    %v336 = vrot.slane %v335, 2
    %v337 = vadd.f32 %v335, %v336
    %v338 = vrot.slane %v337, 1
    %v339 = vadd.f32 %v337, %v338
    %s340 = vtos %v339
    %v341 = vstv %s340
    %v342 = vld [vmem:[#allocation2] sm:$0x1]
    %v343 = vadd.f32 %v342, %v341
    %vm344 = vcmask 0
    %345 = vst.msk [vmem:[#allocation2] sm:$0x1] %vm344, %v343
    // Predicated region
    $region30: #{tpu_custom_call.1} parent=1 // pred_check
      %p346 = pneg %p49
    $region31: #{tpu_custom_call.1} parent=1 // pred_check_branch
      %348 = sbr.rel (%p346) target = $region33
    $region32: #{tpu_custom_call.1} parent=1 // pred_region
      %v349 = vld [vmem:[%s3] sm:$0xff]
      %v350 = vsel %vm330, %v74, 0.0
      %351 = vadd.xlane.f32.xlu0 %v350
      %v352 = vpop.xlane.xlu0 %351
      %v353 = vld [vmem:[#allocation2] sm:$0x1]
      %v354 = vsub.f32 %v352, %v349
      %v355 = vmul.f32 %v354, %v354
      %vm356 = vcmask 7168
      %v357 = vsel %vm356, %v355, 0.0
      %358 = vadd.xlane.f32.xlu0 %v357
      %v359 = vpop.xlane.xlu0 %358
      %v360 = vrot.slane %v359, 4
      %v361 = vadd.f32 %v359, %v360
      %v362 = vrot.slane %v361, 2
      %v363 = vadd.f32 %v361, %v362
      %v364 = vrot.slane %v363, 1
      %v365 = vadd.f32 %v363, %v364
      %s366 = vtos %v365
      %v367 = vstv %s366
      %v368 = vadd.f32 %v353, %v367
      %369 = vst.msk [vmem:[#allocation2] sm:$0x1] %vm344, %v368
      %v370 = vld [vmem:[#allocation3] sm:$0x1]
      %v371 = vrot.slane %v352, 4
      %v372 = vadd.f32 %v352, %v371
      %v373 = vrot.slane %v372, 2
      %v374 = vadd.f32 %v372, %v373
      %v375 = vrot.slane %v374, 1
      %v376 = vadd.f32 %v374, %v375
      %s377 = vtos %v376
      %v378 = vstv %s377
      %v379 = vadd.f32 %v370, %v378
      %380 = vst.msk [vmem:[#allocation3] sm:$0x1] %vm344, %v379
    $region33: #{tpu_custom_call.1} parent=1 // pred_fallthru
      _
    // Predicated region
    $region34: #{tpu_custom_call.1} parent=1 // pred_check
      _
    $region35: #{tpu_custom_call.1} parent=1 // pred_check_branch
      %382 = sbr.rel (%p50) target = $region37
    $region36: #{tpu_custom_call.1} parent=1 // pred_region
      %v383 = vld [vmem:[#allocation2] sm:$0x1]
      %v384 = vld [vmem:[#allocation3] sm:$0x1]
      %v385 = vrcp.pop %v384
      %v386 = vmul.f32 %v384, %v385
      %v387 = vsub.f32 1.0, %v386
      %v388 = vmul.f32 %v385, %v387
      %v389 = vadd.f32 %v385, %v388
      %vm390 = vweird.f32 %v384
      %vm391 = vweird.f32 %v385
      %vm392 = vmor %vm390, %vm391
      %v393 = vsel %vm392, %v385, %v389
      %v394 = vand.u32 2147483647, %v384
      %vm395 = vcmp.eq.f32.partialorder %v394, 8.507059e+37
      %v396 = vand.u32 %v384, 2147483648
      %v397 = vor.u32 1.1754944e-38, %v396
      %v398 = vsel %vm395, %v397, %v393
      %v399 = vmul.f32 %v383, %v398
      %400 = vst.msk [vmem:[#allocation9] sm:$0x1] %vm344, %v399
    $region37: #{tpu_custom_call.1} parent=1 // pred_fallthru
      _
    // Predicated region
    $region38: #{tpu_custom_call.1} parent=1 // pred_check
      _
    $region39: #{tpu_custom_call.1} parent=1 // pred_check_branch
      %402 = sbr.rel (0) target = $region41
    $region40: #{tpu_custom_call.1} parent=1 // pred_region
      %404 = vsyncadd [#allocation6], 0
      %s406 = sshll.u32 [#allocation9], 4
      %s407 = int_to_ptr.vmem [resolvable:$true] %s406
      %s408 = sshll.u32 %s4, 4
      %s409 = int_to_ptr.hbm [resolvable:$true] %s408
      %411 = dma.vmem_to_hbm [thread:$0]  %s407, 16, %s409, [#allocation6]
    $region41: #{tpu_custom_call.1} parent=1 // pred_fallthru
      _
    // Predicated region
    $region42: #{tpu_custom_call.1} parent=1 // pred_check
      _
    $region43: #{tpu_custom_call.1} parent=1 // pred_check_branch
      %413 = sbr.rel (0) target = $region45
    $region44: #{tpu_custom_call.1} parent=1 // pred_region
      %415 = dma.done [#allocation6], 16
    $region45: #{tpu_custom_call.1} parent=1 // pred_fallthru
      _
    %416 = vsyncpa [#allocation5], 1
    %417 = vsyncpa [#allocation8], 1
    %418 = vsyncpa [#allocation6], 1

</llo_original>
